<compile_context>
chip_gen: v6e
topology: v6e:2x2x1
jax: 0.10.0
libtpu: 0.0.40
codegen_flags: <defaults>
</compile_context>

<pallas_src>
import functools

import jax
import jax.numpy as jnp
from jax.experimental import pallas as pl
from jax.experimental.pallas import tpu as pltpu

_LANE = 128      # vreg lane width
_SUBLANE = 8     # vreg sublane count (f32)


def _round_up(n: int, m: int) -> int:
    return ((n + m - 1) // m) * m


def _mlp_kernel(*refs, num_layers: int, lane_pad_in: int):
    """Fused MLP forward for one (TB, din) batch tile.

    refs layout: (x_ref, w0_ref, b0_ref, ..., w{L-1}_ref, b{L-1}_ref, o_ref)
    Weights are bf16 (MXU-native on v5e/v6e/v7x); accumulation, bias add and
    tanh are f32. Intermediate activations stay as values (vregs/VMEM).
    """
    x_ref = refs[0]
    o_ref = refs[-1]
    wb = refs[1:-1]

    h = x_ref[...]                                            # (TB, din) f32
    if lane_pad_in > 0:
        # Zero-pad the feature (lane) dim in-VMEM; the matching weight rows
        # are zero, so this is exactly correctness-preserving.
        h = jnp.concatenate(
            [h, jnp.zeros((h.shape[0], lane_pad_in), h.dtype)], axis=-1)

    for l in range(num_layers):
        w = wb[2 * l][...]                                    # bf16 (pin, pout)
        b = wb[2 * l + 1][...]                                # f32  (1,   pout)
        h = jnp.dot(h.astype(jnp.bfloat16), w,
                    preferred_element_type=jnp.float32) + b   # MXU + VPU (f32)
        if l < num_layers - 1:
            h = jnp.tanh(h)                                   # EUP (f32)

    o_ref[...] = h.astype(o_ref.dtype)                        # (TB, dout)


def fully_connected_network(x: jax.Array, params) -> jax.Array:
    """Forward pass of FullyConnectedNetwork via one fused Pallas kernel.

    x: (*batch, input_dim); params: list of (W, b) with W shaped (n_in, n_out)
    (transpose of PyTorch's nn.Linear weight). Hidden layers use tanh, output
    layer is identity.
    """
    batch_shape = x.shape[:-1]
    din = x.shape[-1]
    x2 = x.reshape(-1, din)
    B = x2.shape[0]

    num_layers = len(params)
    dims = [din] + [w.shape[1] for (w, _) in params]
    dout = dims[-1]
    # Lane-dense padded widths for all *inner* feature dims; the final output
    # width stays unpadded so the kernel writes exactly (TB, dout).
    pdims = [_round_up(d, _LANE) for d in dims[:-1]] + [dout]

    # Batch tile: large tiles amortize per-step overhead; when the batch is big
    # enough, ensure >=2 grid steps so both v7x TensorCores get work.
    TB = min(1024, _round_up(B, _SUBLANE))
    if B >= 2 * _SUBLANE and pl.cdiv(B, TB) < 2:
        TB = _round_up(pl.cdiv(B, 2), _SUBLANE)
    grid = (pl.cdiv(B, TB),)      # partial last block: OOB reads are garbage
                                  # rows (independent), OOB writes are dropped.

    inputs = [x2]
    in_specs = [pl.BlockSpec((TB, din), lambda i: (i, 0))]     # unpadded input
    for l, (w, b) in enumerate(params):
        n_in, n_out = w.shape
        pin, pout = pdims[l], pdims[l + 1]
        # Tiny, one-time pads; weights in bf16 (MXU operands), biases in f32
        # (epilogue). Padded rows/cols are zero -> exactly correct.
        w_pad = jnp.zeros((pin, pout), jnp.bfloat16).at[:n_in, :n_out].set(
            w.astype(jnp.bfloat16))
        b_pad = jnp.zeros((1, pout), jnp.float32).at[0, :n_out].set(
            b.astype(jnp.float32))
        inputs.extend([w_pad, b_pad])
        # Constant index maps -> weights/biases DMA'd once, VMEM-resident
        # across all batch-grid steps.
        in_specs.extend([
            pl.BlockSpec((pin, pout), lambda i: (0, 0)),
            pl.BlockSpec((1, pout), lambda i: (0, 0)),
        ])

    out_spec = pl.BlockSpec((TB, dout), lambda i: (i, 0))      # unpadded output

    # Advisory cost estimate from real (unpadded) dims.
    flops = 2 * B * sum(dims[l] * dims[l + 1] for l in range(num_layers))
    transcendentals = B * sum(dims[1:-1])
    bytes_accessed = (
        4 * B * din + 4 * B * dout
        + sum(2 * pdims[l] * pdims[l + 1] + 4 * pdims[l + 1]
              for l in range(num_layers))
    )

    kernel = functools.partial(_mlp_kernel, num_layers=num_layers,
                               lane_pad_in=pdims[0] - din)
    y = pl.pallas_call(
        kernel,
        out_shape=jax.ShapeDtypeStruct((B, dout), x2.dtype),
        grid=grid,
        in_specs=in_specs,
        out_specs=out_spec,
        compiler_params=pltpu.CompilerParams(
            dimension_semantics=("parallel",),   # megacore sharding on v7x
        ),
        cost_estimate=pl.CostEstimate(
            flops=flops,
            transcendentals=transcendentals,
            bytes_accessed=bytes_accessed,
        ),
    )(*inputs)

    return y.reshape(*batch_shape, dout)


def init_fcn_params(key: jax.Array, nodes: list[int], dtype=jnp.float32):
    """Init mirroring nn.Linear's U(-1/sqrt(fan_in), 1/sqrt(fan_in)).

    Returns a list of (W, b) with W of shape (n_in, n_out)."""
    params = []
    for n_in, n_out in zip(nodes[:-1], nodes[1:]):
        key, kw, kb = jax.random.split(key, 3)
        bound = 1.0 / (n_in ** 0.5)
        w = jax.random.uniform(kw, (n_in, n_out), dtype, minval=-bound, maxval=bound)
        b = jax.random.uniform(kb, (n_out,), dtype, minval=-bound, maxval=bound)
        params.append((w, b))
    return params


def _reference_forward(x, params):
    """Pure-JAX f32 reference for correctness checking."""
    batch_shape = x.shape[:-1]
    x2 = x.reshape(-1, x.shape[-1])
    for w, b in params[:-1]:
        x2 = jnp.tanh(x2 @ w + b)
    w, b = params[-1]
    x2 = x2 @ w + b
    return x2.reshape(*batch_shape, x2.shape[-1])


if __name__ == "__main__":
    key = jax.random.PRNGKey(0)
    nodes = [4, 32, 32, 3]          # input_dim=4, two hidden layers of 32, output_dim=3
    kx, kp = jax.random.split(key)
    # Multi-dim batch to exercise *batch flattening: (*batch, input_dim) = (2, 8, 4)
    x = jax.random.normal(kx, (2, 8, nodes[0]), jnp.float32)
    params = init_fcn_params(kp, nodes)

    fwd = jax.jit(fully_connected_network)
    y = fwd(x, params)
    y = jax.block_until_ready(y)

    y_ref = _reference_forward(x, params)
    assert y.shape == (2, 8, nodes[-1]), y.shape
    # bf16 MXU operands vs f32 reference -> loose-but-meaningful tolerance.
    assert jnp.allclose(y, y_ref, atol=5e-2, rtol=5e-2), (
        "mismatch vs reference: max abs diff = "
        f"{float(jnp.max(jnp.abs(y - y_ref)))}")

    print("KERNEL_OK")
</pallas_src>

<mosaic_0001>
module attributes {stable_mosaic.version = 11 : i64} {
  func.func @_mlp_kernel(%arg0: i32, %arg1: memref<8x4xf32, #tpu.memory_space<vmem>>, %arg2: memref<128x128xbf16, #tpu.memory_space<vmem>>, %arg3: memref<1x128xf32, #tpu.memory_space<vmem>>, %arg4: memref<128x128xbf16, #tpu.memory_space<vmem>>, %arg5: memref<1x128xf32, #tpu.memory_space<vmem>>, %arg6: memref<128x3xbf16, #tpu.memory_space<vmem>>, %arg7: memref<1x3xf32, #tpu.memory_space<vmem>>, %arg8: memref<8x3xf32, #tpu.memory_space<vmem>>) attributes {dimension_semantics = [#tpu.dimension_semantics<parallel>], iteration_bounds = array<i64: 2>, scalar_prefetch = 0 : i64, scratch_operands = 0 : i64, tpu.core_type = #tpu.core_type<tc>, window_params = [{transform_indices = @transform_0, window_bounds = array<i64: 8, 4>}, {pipeline_mode = #tpu.pipeline_mode<synchronous>, transform_indices = @transform_1, window_bounds = array<i64: 128, 128>}, {pipeline_mode = #tpu.pipeline_mode<synchronous>, transform_indices = @transform_2, window_bounds = array<i64: 1, 128>}, {pipeline_mode = #tpu.pipeline_mode<synchronous>, transform_indices = @transform_3, window_bounds = array<i64: 128, 128>}, {pipeline_mode = #tpu.pipeline_mode<synchronous>, transform_indices = @transform_4, window_bounds = array<i64: 1, 128>}, {pipeline_mode = #tpu.pipeline_mode<synchronous>, transform_indices = @transform_5, window_bounds = array<i64: 128, 3>}, {pipeline_mode = #tpu.pipeline_mode<synchronous>, transform_indices = @transform_6, window_bounds = array<i64: 1, 3>}, {transform_indices = @transform_7, window_bounds = array<i64: 8, 3>}]} {
    %c0 = arith.constant 0 : index
    %c0_0 = arith.constant 0 : index
    %0 = vector.load %arg1[%c0, %c0_0] : memref<8x4xf32, #tpu.memory_space<vmem>>, vector<8x4xf32>
    %cst = arith.constant 0.000000e+00 : f32
    %1 = vector.broadcast %cst : f32 to vector<8x124xf32>
    %2 = tpu.concatenate %0, %1 in 1 : vector<8x4xf32>, vector<8x124xf32> -> vector<8x128xf32>
    %c0_1 = arith.constant 0 : index
    %c0_2 = arith.constant 0 : index
    %3 = vector.load %arg2[%c0_1, %c0_2] : memref<128x128xbf16, #tpu.memory_space<vmem>>, vector<128x128xbf16>
    %c0_3 = arith.constant 0 : index
    %c0_4 = arith.constant 0 : index
    %4 = vector.load %arg3[%c0_3, %c0_4] : memref<1x128xf32, #tpu.memory_space<vmem>>, vector<1x128xf32>
    %5 = arith.truncf %2 : vector<8x128xf32> to vector<8x128xbf16>
    %cst_5 = arith.constant dense<0.000000e+00> : vector<8x128xf32>
    %6 = tpu.matmul %5, %3, %cst_5 {dimension_numbers = #tpu.dot_dimension_numbers<[1], [0], [0], [1], [0, 0, 1, 1], [], []>} : vector<8x128xbf16>, vector<128x128xbf16>, vector<8x128xf32> -> vector<8x128xf32>
    %7 = vector.broadcast %4 : vector<1x128xf32> to vector<8x128xf32>
    %8 = arith.addf %6, %7 : vector<8x128xf32>
    %9 = math.tanh %8 : vector<8x128xf32>
    %c0_6 = arith.constant 0 : index
    %c0_7 = arith.constant 0 : index
    %10 = vector.load %arg4[%c0_6, %c0_7] : memref<128x128xbf16, #tpu.memory_space<vmem>>, vector<128x128xbf16>
    %c0_8 = arith.constant 0 : index
    %c0_9 = arith.constant 0 : index
    %11 = vector.load %arg5[%c0_8, %c0_9] : memref<1x128xf32, #tpu.memory_space<vmem>>, vector<1x128xf32>
    %12 = arith.truncf %9 : vector<8x128xf32> to vector<8x128xbf16>
    %cst_10 = arith.constant dense<0.000000e+00> : vector<8x128xf32>
    %13 = tpu.matmul %12, %10, %cst_10 {dimension_numbers = #tpu.dot_dimension_numbers<[1], [0], [0], [1], [0, 0, 1, 1], [], []>} : vector<8x128xbf16>, vector<128x128xbf16>, vector<8x128xf32> -> vector<8x128xf32>
    %14 = vector.broadcast %11 : vector<1x128xf32> to vector<8x128xf32>
    %15 = arith.addf %13, %14 : vector<8x128xf32>
    %16 = math.tanh %15 : vector<8x128xf32>
    %c0_11 = arith.constant 0 : index
    %c0_12 = arith.constant 0 : index
    %17 = vector.load %arg6[%c0_11, %c0_12] : memref<128x3xbf16, #tpu.memory_space<vmem>>, vector<128x3xbf16>
    %c0_13 = arith.constant 0 : index
    %c0_14 = arith.constant 0 : index
    %18 = vector.load %arg7[%c0_13, %c0_14] : memref<1x3xf32, #tpu.memory_space<vmem>>, vector<1x3xf32>
    %19 = arith.truncf %16 : vector<8x128xf32> to vector<8x128xbf16>
    %cst_15 = arith.constant dense<0.000000e+00> : vector<8x3xf32>
    %20 = tpu.matmul %19, %17, %cst_15 {dimension_numbers = #tpu.dot_dimension_numbers<[1], [0], [0], [1], [0, 0, 1, 1], [], []>} : vector<8x128xbf16>, vector<128x3xbf16>, vector<8x3xf32> -> vector<8x3xf32>
    %21 = vector.broadcast %18 : vector<1x3xf32> to vector<8x3xf32>
    %22 = arith.addf %20, %21 : vector<8x3xf32>
    %c0_16 = arith.constant 0 : index
    %c0_17 = arith.constant 0 : index
    %23 = vector.load %arg8[%c0_16, %c0_17] : memref<8x3xf32, #tpu.memory_space<vmem>>, vector<8x3xf32>
    tpu.vector_store %arg8[%c0_16, %c0_17], %22 {strides = array<i32>} : memref<8x3xf32, #tpu.memory_space<vmem>>, vector<8x3xf32>,
    return
  }
  func.func @transform_0(%arg0: i32) -> (i32, i32) {
    %c0_i32 = arith.constant 0 : i32
    %c0_i32_0 = arith.constant 0 : i32
    return %arg0, %c0_i32 : i32, i32
  }
  func.func @transform_1(%arg0: i32) -> (i32, i32) {
    %c0_i32 = arith.constant 0 : i32
    %c0_i32_0 = arith.constant 0 : i32
    %c0_i32_1 = arith.constant 0 : i32
    return %c0_i32, %c0_i32_0 : i32, i32
  }
  func.func @transform_2(%arg0: i32) -> (i32, i32) {
    %c0_i32 = arith.constant 0 : i32
    %c0_i32_0 = arith.constant 0 : i32
    %c0_i32_1 = arith.constant 0 : i32
    return %c0_i32, %c0_i32_0 : i32, i32
  }
  func.func @transform_3(%arg0: i32) -> (i32, i32) {
    %c0_i32 = arith.constant 0 : i32
    %c0_i32_0 = arith.constant 0 : i32
    %c0_i32_1 = arith.constant 0 : i32
    return %c0_i32, %c0_i32_0 : i32, i32
  }
  func.func @transform_4(%arg0: i32) -> (i32, i32) {
    %c0_i32 = arith.constant 0 : i32
    %c0_i32_0 = arith.constant 0 : i32
    %c0_i32_1 = arith.constant 0 : i32
    return %c0_i32, %c0_i32_0 : i32, i32
  }
  func.func @transform_5(%arg0: i32) -> (i32, i32) {
    %c0_i32 = arith.constant 0 : i32
    %c0_i32_0 = arith.constant 0 : i32
    %c0_i32_1 = arith.constant 0 : i32
    return %c0_i32, %c0_i32_0 : i32, i32
  }
  func.func @transform_6(%arg0: i32) -> (i32, i32) {
    %c0_i32 = arith.constant 0 : i32
    %c0_i32_0 = arith.constant 0 : i32
    %c0_i32_1 = arith.constant 0 : i32
    return %c0_i32, %c0_i32_0 : i32, i32
  }
  func.func @transform_7(%arg0: i32) -> (i32, i32) {
    %c0_i32 = arith.constant 0 : i32
    %c0_i32_0 = arith.constant 0 : i32
    return %arg0, %c0_i32 : i32, i32
  }
}

</mosaic_0001>

<llo_original>
// kernel: fully_connected_network.1
$region0: #{fully_connected_network.1}
  #allocation0 [shape = 'u32[]', space=smem, size = 0x4, offset = 0x4, fixed_abs, tag = 'smem constant byte address 0x4 - core index']
  #allocation1 [shape = 'u32[144,128]{1,0:T(1,128)}', space=vmem, size = 0x12000, scoped, tag = 'internal scratch']
  %s0 = inlined_call_operand.vmem [shape: f32[16,4], index: 0, kind: input, shape index: {}]
  %s1 = inlined_call_operand.vmem [shape: bf16[128,128], index: 1, kind: input, shape index: {}]
  %s2 = inlined_call_operand.vmem [shape: f32[1,128], index: 2, kind: input, shape index: {}]
  %s3 = inlined_call_operand.vmem [shape: bf16[128,128], index: 3, kind: input, shape index: {}]
  %s4 = inlined_call_operand.vmem [shape: f32[1,128], index: 4, kind: input, shape index: {}]
  %s5 = inlined_call_operand.vmem [shape: bf16[128,3], index: 5, kind: input, shape index: {}]
  %s6 = inlined_call_operand.vmem [shape: f32[1,3], index: 6, kind: input, shape index: {}]
  %s7 = inlined_call_operand.vmem [shape: f32[16,3], index: 7, kind: output, shape index: {}]
  %s8 = sld [smem:[#allocation0]]
  $region61: #{fully_connected_network.1} parent=0
    _
  %s10 = ssub.s32 1, %s8
  %s11 = scalar_select 0, %s10, %s8
  loop: start=0, step=1, limit=4
  $region2: #{fully_connected_network.1} parent=0 // loop_pre_header
    _
  $region3: #{fully_connected_network.1} parent=0 // loop_header
    %s13 = sphi 0, %s17
    %p14 = scmp.ge.s32.totalorder %s13, 4
    %s23 = sphi 0, %s25
    %s26 = sphi 0, %s23
    %s27 = sphi 0, %s26
    %s43 = sphi 0, %s27
    %s47 = sphi 0, %s47
    %s49 = sphi 0, %s47
    %s50 = sphi 0, %s49
    %s64 = sphi 0, %s50
    %s68 = sphi 0, %s68
    %s70 = sphi 0, %s68
    %s71 = sphi 0, %s70
    %s85 = sphi 0, %s71
    %s89 = sphi 0, %s89
    %s91 = sphi 0, %s89
    %s92 = sphi 0, %s91
    %s106 = sphi 0, %s92
    %s110 = sphi 0, %s110
    %s112 = sphi 0, %s110
    %s113 = sphi 0, %s112
    %s127 = sphi 0, %s113
    %s131 = sphi 0, %s131
    %s133 = sphi 0, %s131
    %s134 = sphi 0, %s133
    %s148 = sphi 0, %s134
    %s152 = sphi 0, %s152
    %s154 = sphi 0, %s152
    %s155 = sphi 0, %s154
    %s169 = sphi 0, %s155
    %s175 = sphi 0, %s177
    %s178 = sphi 0, %s175
    %s179 = sphi 0, %s178
    %s195 = sphi 0, %s179
  $region4: #{fully_connected_network.1} parent=0 // loop_header_branch
    %16 = sbr.rel (%p14) target = $region8
  $region5: #{fully_connected_network.1} parent=0 // loop_body
    %s18 = ssub.s32 %s13, 1
    %s19 = ssub.s32 %s13, 2
    %s20 = sadd.s32 %s13, 1
    %s21 = ssub.s32 %s13, %s20
    %p22 = scmp.eq.s32.totalorder %s21, 0
    %s24 = sadd.s32 %s23, 1
    %s25 = scalar_select %p22, %s23, %s24
    %p28 = pneg %p22
    %p29 = scmp.eq.s32.totalorder %s13, 1
    %p30 = por %p28, %p29
    %p31 = scmp.ne.s32.totalorder %s23, %s26
    %p32 = scmp.eq.s32.totalorder %s13, 0
    %p33 = por %p31, %p32
    %p34 = scmp.ne.s32.totalorder %s23, %s26
    %p35 = scmp.eq.s32.totalorder %s18, 1
    %p36 = por %p34, %p35
    %p37 = scmp.ne.s32.totalorder %s26, %s27
    %p38 = scmp.eq.s32.totalorder %s18, 0
    %p39 = por %p37, %p38
    %p40 = scmp.ne.s32.totalorder %s26, %s27
    %p41 = scmp.eq.s32.totalorder %s19, 1
    %p42 = por %p40, %p41
    %p44 = scmp.ne.s32.totalorder %s27, %s43
    %p45 = scmp.eq.s32.totalorder %s19, 0
    %p46 = por %p44, %p45
    %s48 = sadd.s32 %s47, 1
    %p51 = scmp.eq.s32.totalorder %s13, 1
    %p52 = scmp.ne.s32.totalorder %s47, %s49
    %p53 = scmp.eq.s32.totalorder %s13, 0
    %p54 = por %p52, %p53
    %p55 = scmp.ne.s32.totalorder %s47, %s49
    %p56 = scmp.eq.s32.totalorder %s18, 1
    %p57 = por %p55, %p56
    %p58 = scmp.ne.s32.totalorder %s49, %s50
    %p59 = scmp.eq.s32.totalorder %s18, 0
    %p60 = por %p58, %p59
    %p61 = scmp.ne.s32.totalorder %s49, %s50
    %p62 = scmp.eq.s32.totalorder %s19, 1
    %p63 = por %p61, %p62
    %p65 = scmp.ne.s32.totalorder %s50, %s64
    %p66 = scmp.eq.s32.totalorder %s19, 0
    %p67 = por %p65, %p66
    %s69 = sadd.s32 %s68, 1
    %p72 = scmp.eq.s32.totalorder %s13, 1
    %p73 = scmp.ne.s32.totalorder %s68, %s70
    %p74 = scmp.eq.s32.totalorder %s13, 0
    %p75 = por %p73, %p74
    %p76 = scmp.ne.s32.totalorder %s68, %s70
    %p77 = scmp.eq.s32.totalorder %s18, 1
    %p78 = por %p76, %p77
    %p79 = scmp.ne.s32.totalorder %s70, %s71
    %p80 = scmp.eq.s32.totalorder %s18, 0
    %p81 = por %p79, %p80
    %p82 = scmp.ne.s32.totalorder %s70, %s71
    %p83 = scmp.eq.s32.totalorder %s19, 1
    %p84 = por %p82, %p83
    %p86 = scmp.ne.s32.totalorder %s71, %s85
    %p87 = scmp.eq.s32.totalorder %s19, 0
    %p88 = por %p86, %p87
    %s90 = sadd.s32 %s89, 1
    %p93 = scmp.eq.s32.totalorder %s13, 1
    %p94 = scmp.ne.s32.totalorder %s89, %s91
    %p95 = scmp.eq.s32.totalorder %s13, 0
    %p96 = por %p94, %p95
    %p97 = scmp.ne.s32.totalorder %s89, %s91
    %p98 = scmp.eq.s32.totalorder %s18, 1
    %p99 = por %p97, %p98
    %p100 = scmp.ne.s32.totalorder %s91, %s92
    %p101 = scmp.eq.s32.totalorder %s18, 0
    %p102 = por %p100, %p101
    %p103 = scmp.ne.s32.totalorder %s91, %s92
    %p104 = scmp.eq.s32.totalorder %s19, 1
    %p105 = por %p103, %p104
    %p107 = scmp.ne.s32.totalorder %s92, %s106
    %p108 = scmp.eq.s32.totalorder %s19, 0
    %p109 = por %p107, %p108
    %s111 = sadd.s32 %s110, 1
    %p114 = scmp.eq.s32.totalorder %s13, 1
    %p115 = scmp.ne.s32.totalorder %s110, %s112
    %p116 = scmp.eq.s32.totalorder %s13, 0
    %p117 = por %p115, %p116
    %p118 = scmp.ne.s32.totalorder %s110, %s112
    %p119 = scmp.eq.s32.totalorder %s18, 1
    %p120 = por %p118, %p119
    %p121 = scmp.ne.s32.totalorder %s112, %s113
    %p122 = scmp.eq.s32.totalorder %s18, 0
    %p123 = por %p121, %p122
    %p124 = scmp.ne.s32.totalorder %s112, %s113
    %p125 = scmp.eq.s32.totalorder %s19, 1
    %p126 = por %p124, %p125
    %p128 = scmp.ne.s32.totalorder %s113, %s127
    %p129 = scmp.eq.s32.totalorder %s19, 0
    %p130 = por %p128, %p129
    %s132 = sadd.s32 %s131, 1
    %p135 = scmp.eq.s32.totalorder %s13, 1
    %p136 = scmp.ne.s32.totalorder %s131, %s133
    %p137 = scmp.eq.s32.totalorder %s13, 0
    %p138 = por %p136, %p137
    %p139 = scmp.ne.s32.totalorder %s131, %s133
    %p140 = scmp.eq.s32.totalorder %s18, 1
    %p141 = por %p139, %p140
    %p142 = scmp.ne.s32.totalorder %s133, %s134
    %p143 = scmp.eq.s32.totalorder %s18, 0
    %p144 = por %p142, %p143
    %p145 = scmp.ne.s32.totalorder %s133, %s134
    %p146 = scmp.eq.s32.totalorder %s19, 1
    %p147 = por %p145, %p146
    %p149 = scmp.ne.s32.totalorder %s134, %s148
    %p150 = scmp.eq.s32.totalorder %s19, 0
    %p151 = por %p149, %p150
    %s153 = sadd.s32 %s152, 1
    %p156 = scmp.eq.s32.totalorder %s13, 1
    %p157 = scmp.ne.s32.totalorder %s152, %s154
    %p158 = scmp.eq.s32.totalorder %s13, 0
    %p159 = por %p157, %p158
    %p160 = scmp.ne.s32.totalorder %s152, %s154
    %p161 = scmp.eq.s32.totalorder %s18, 1
    %p162 = por %p160, %p161
    %p163 = scmp.ne.s32.totalorder %s154, %s155
    %p164 = scmp.eq.s32.totalorder %s18, 0
    %p165 = por %p163, %p164
    %p166 = scmp.ne.s32.totalorder %s154, %s155
    %p167 = scmp.eq.s32.totalorder %s19, 1
    %p168 = por %p166, %p167
    %p170 = scmp.ne.s32.totalorder %s155, %s169
    %p171 = scmp.eq.s32.totalorder %s19, 0
    %p172 = por %p170, %p171
    %s173 = ssub.s32 %s13, %s20
    %p174 = scmp.eq.s32.totalorder %s173, 0
    %s176 = sadd.s32 %s175, 1
    %s177 = scalar_select %p174, %s175, %s176
    %p180 = pneg %p174
    %p181 = scmp.eq.s32.totalorder %s13, 1
    %p182 = por %p180, %p181
    %p183 = scmp.ne.s32.totalorder %s175, %s178
    %p184 = scmp.eq.s32.totalorder %s13, 0
    %p185 = por %p183, %p184
    %p186 = scmp.ne.s32.totalorder %s175, %s178
    %p187 = scmp.eq.s32.totalorder %s18, 1
    %p188 = por %p186, %p187
    %p189 = scmp.ne.s32.totalorder %s178, %s179
    %p190 = scmp.eq.s32.totalorder %s18, 0
    %p191 = por %p189, %p190
    %p192 = scmp.ne.s32.totalorder %s178, %s179
    %p193 = scmp.eq.s32.totalorder %s19, 1
    %p194 = por %p192, %p193
    %p196 = scmp.ne.s32.totalorder %s179, %s195
    %p197 = scmp.eq.s32.totalorder %s19, 0
    %p198 = por %p196, %p197
    %p199 = scmp.le.s32.totalorder 1, %s13
    %p200 = scmp.lt.s32.totalorder %s13, 3
    %p201 = pnand %p199, %p200
    %p202 = pneg %p201
    // Predicated region
    $region9: #{fully_connected_network.1} parent=5 // pred_check
      _
    $region10: #{fully_connected_network.1} parent=5 // pred_check_branch
      %204 = sbr.rel (%p201) target = $region12
    $region11: #{fully_connected_network.1} parent=5 // pred_region
      %s205 = ssub.s32 %s13, 1
      // Predicated region
      $region13: #{fully_connected_network.1} parent=11 // pred_check
        %p206 = pneg %p60
      $region14: #{fully_connected_network.1} parent=11 // pred_check_branch
        %208 = sbr.rel (%p206) target = $region16
      $region15: #{fully_connected_network.1} parent=11 // pred_region
        _
      $region16: #{fully_connected_network.1} parent=11 // pred_fallthru
        _
      // Predicated region
      $region17: #{fully_connected_network.1} parent=11 // pred_check
        %p209 = pneg %p81
      $region18: #{fully_connected_network.1} parent=11 // pred_check_branch
        %211 = sbr.rel (%p209) target = $region20
      $region19: #{fully_connected_network.1} parent=11 // pred_region
        _
      $region20: #{fully_connected_network.1} parent=11 // pred_fallthru
        _
      // Predicated region
      $region21: #{fully_connected_network.1} parent=11 // pred_check
        %p212 = pneg %p102
      $region22: #{fully_connected_network.1} parent=11 // pred_check_branch
        %214 = sbr.rel (%p212) target = $region24
      $region23: #{fully_connected_network.1} parent=11 // pred_region
        _
      $region24: #{fully_connected_network.1} parent=11 // pred_fallthru
        _
      // Predicated region
      $region25: #{fully_connected_network.1} parent=11 // pred_check
        %p215 = pneg %p123
      $region26: #{fully_connected_network.1} parent=11 // pred_check_branch
        %217 = sbr.rel (%p215) target = $region28
      $region27: #{fully_connected_network.1} parent=11 // pred_region
        _
      $region28: #{fully_connected_network.1} parent=11 // pred_fallthru
        _
      // Predicated region
      $region29: #{fully_connected_network.1} parent=11 // pred_check
        %p218 = pneg %p144
      $region30: #{fully_connected_network.1} parent=11 // pred_check_branch
        %220 = sbr.rel (%p218) target = $region32
      $region31: #{fully_connected_network.1} parent=11 // pred_region
        _
      $region32: #{fully_connected_network.1} parent=11 // pred_fallthru
        _
      // Predicated region
      $region33: #{fully_connected_network.1} parent=11 // pred_check
        %p221 = pneg %p165
      $region34: #{fully_connected_network.1} parent=11 // pred_check_branch
        %223 = sbr.rel (%p221) target = $region36
      $region35: #{fully_connected_network.1} parent=11 // pred_region
        _
      $region36: #{fully_connected_network.1} parent=11 // pred_fallthru
        _
    $region12: #{fully_connected_network.1} parent=5 // pred_fallthru
      _
    %p224 = scmp.lt.s32.totalorder %s13, 2
    // Predicated region
    $region37: #{fully_connected_network.1} parent=5 // pred_check
      %p225 = pneg %p224
    $region38: #{fully_connected_network.1} parent=5 // pred_check_branch
      %227 = sbr.rel (%p225) target = $region40
    $region39: #{fully_connected_network.1} parent=5 // pred_region
      // Predicated region
      $region41: #{fully_connected_network.1} parent=39 // pred_check
        %p228 = pneg %p33
      $region42: #{fully_connected_network.1} parent=39 // pred_check_branch
        %230 = sbr.rel (%p228) target = $region44
      $region43: #{fully_connected_network.1} parent=39 // pred_region
        %p231 = scmp.lt.s32.totalorder %s13, 1
        %s232 = scalar_select %p231, %s13, 1
        %s233 = smul.addr %s232, 8
        %s234 = scalar_lea.vmem %s0, %s233
      $region44: #{fully_connected_network.1} parent=39 // pred_fallthru
        _
    $region40: #{fully_connected_network.1} parent=5 // pred_fallthru
      _
    %p235 = scmp.le.s32.totalorder 1, %s13
    %p236 = scmp.lt.s32.totalorder %s13, 3
    %p237 = pnand %p235, %p236
    %p238 = pneg %p237
    // Predicated region
    $region45: #{fully_connected_network.1} parent=5 // pred_check
      _
    $region46: #{fully_connected_network.1} parent=5 // pred_check_branch
      %240 = sbr.rel (%p237) target = $region48
    $region47: #{fully_connected_network.1} parent=5 // pred_region
      %s241 = ssub.s32 %s13, 1
      %p242 = scmp.lt.s32.totalorder %s18, 1
      %s243 = scalar_select %p242, %s18, 1
      %s244 = smul.addr %s243, 8
      %s245 = scalar_lea.vmem %s0, %s244
      %p246 = pneg %p39
      %p247 = pneg %p36
      %p248 = pneg %p60
      %p249 = pneg %p57
      %p250 = pneg %p81
      %p251 = pneg %p78
      %p252 = pneg %p102
      %p253 = pneg %p99
      %p254 = pneg %p123
      %p255 = pneg %p120
      %p256 = pneg %p144
      %p257 = pneg %p141
      %p258 = pneg %p165
      %p259 = pneg %p162
      %p260 = pneg %p191
      %p261 = pneg %p188
      %p262 = scmp.lt.s32.totalorder %s18, 1
      %s263 = scalar_select %p262, %s18, 1
      %s264 = smul.addr %s263, 8
      %s265 = scalar_lea.vmem %s7, %s264
      %p266 = scmp.lt.s32.totalorder %s18, 1
      %s267 = scalar_select %p266, %s18, 1
      %s268 = smul.addr %s267, 8
      %s269 = scalar_lea.vmem %s0, %s268
      %p270 = scmp.lt.s32.totalorder %s18, 1
      %s271 = scalar_select %p270, %s18, 1
      %s272 = smul.addr %s271, 8
      %s273 = scalar_lea.vmem %s7, %s272
      %v275 = vld [vmem:[%s269] sm:$0xff]
      %vm276 = vcmask 31744
      %v277 = vsel %vm276, %v275, 0.0
      %v278 = vld [vmem:[%s1] sm:$0xf]
      %v279 = vld [vmem:[%s1 + $0x4] sm:$0xf]
      %v280 = vld [vmem:[%s1 + $0x8] sm:$0xf]
      %v281 = vld [vmem:[%s1 + $0xc] sm:$0xf]
      %v282 = vld [vmem:[%s1 + $0x10] sm:$0xf]
      %v283 = vld [vmem:[%s1 + $0x14] sm:$0xf]
      %v284 = vld [vmem:[%s1 + $0x18] sm:$0xf]
      %v285 = vld [vmem:[%s1 + $0x1c] sm:$0xf]
      %v286 = vld [vmem:[%s1 + $0x20] sm:$0xf]
      %v287 = vld [vmem:[%s1 + $0x24] sm:$0xf]
      %v288 = vld [vmem:[%s1 + $0x28] sm:$0xf]
      %v289 = vld [vmem:[%s1 + $0x2c] sm:$0xf]
      %v290 = vld [vmem:[%s1 + $0x30] sm:$0xf]
      %v291 = vld [vmem:[%s1 + $0x34] sm:$0xf]
      %v292 = vld [vmem:[%s1 + $0x38] sm:$0xf]
      %v293 = vld [vmem:[%s1 + $0x3c] sm:$0xf]
      %v294 = vld [vmem:[%s2] sm:$0x1]
      %v295 = vpack.c.bf16 %v277, %v277
      %v297 = vlaneseq
      %v298 = vshrl.u32 %v297, 7
      %v299 = vsub.s32 0, %v298
      %v300 = vrot.slane %v294, %v299
      %v318 = vunpack.c.l.b16 %v278
      %v319 = vunpack.c.l.b16 %v279
      %v320 = vunpack.c.l.b16 %v280
      %v321 = vunpack.c.l.b16 %v281
      %v322 = vunpack.c.l.b16 %v282
      %v323 = vunpack.c.l.b16 %v283
      %v324 = vunpack.c.l.b16 %v284
      %v325 = vunpack.c.l.b16 %v285
      %v326 = vunpack.c.l.b16 %v286
      %v327 = vunpack.c.l.b16 %v287
      %v328 = vunpack.c.l.b16 %v288
      %v329 = vunpack.c.l.b16 %v289
      %v330 = vunpack.c.l.b16 %v290
      %v331 = vunpack.c.l.b16 %v291
      %v332 = vunpack.c.l.b16 %v292
      %v333 = vunpack.c.l.b16 %v293
      %v334 = vpack.c.b16 %v319, %v318
      %v335 = vpack.c.b16 %v321, %v320
      %v336 = vpack.c.b16 %v323, %v322
      %v337 = vpack.c.b16 %v325, %v324
      %v338 = vpack.c.b16 %v327, %v326
      %v339 = vpack.c.b16 %v329, %v328
      %v340 = vpack.c.b16 %v331, %v330
      %v341 = vpack.c.b16 %v333, %v332
      %350 = vmatprep.subr.bf16.mxu0 0
      %351 = vmatpush1.bf16.msra.mxu0 %v341
      %352 = vmatprep.subr.bf16.mxu0 0
      %353 = vmatpush1.bf16.msra.mxu0 %v340
      %354 = vmatprep.subr.bf16.mxu0 0
      %355 = vmatpush1.bf16.msra.mxu0 %v339
      %356 = vmatprep.subr.bf16.mxu0 0
      %357 = vmatpush1.bf16.msra.mxu0 %v338
      %358 = vmatprep.subr.bf16.mxu0 0
      %359 = vmatpush1.bf16.msra.mxu0 %v337
      %360 = vmatprep.subr.bf16.mxu0 0
      %361 = vmatpush1.bf16.msra.mxu0 %v336
      %362 = vmatprep.subr.bf16.mxu0 0
      %363 = vmatpush1.bf16.msra.mxu0 %v335
      %364 = vmatprep.subr.bf16.mxu0 0
      %365 = vmatpush1.bf16.msra.mxu0 %v334
      %366 = vmatprep.subr.bf16.mxu0 0
      %367 = vmatpush2.bf16.msra.mxu0 0
      %368 = vmatprep.subr.bf16.mxu0 0
      %369 = vmatpush2.bf16.msra.mxu0 0
      %370 = vmatprep.subr.bf16.mxu0 0
      %371 = vmatpush2.bf16.msra.mxu0 0
      %372 = vmatprep.subr.bf16.mxu0 0
      %373 = vmatpush2.bf16.msra.mxu0 0
      %374 = vmatprep.subr.bf16.mxu0 0
      %375 = vmatpush2.bf16.msra.mxu0 0
      %376 = vmatprep.subr.bf16.mxu0 0
      %377 = vmatpush2.bf16.msra.mxu0 0
      %378 = vmatprep.subr.bf16.mxu0 0
      %379 = vmatpush2.bf16.msra.mxu0 0
      %380 = vmatprep.subr.bf16.mxu0 0
      %381 = vmatpush2.bf16.msra.mxu0 0
      %382 = vmatprep.mubr.bf16.mxu0 0
      %383 = vmatmul.mubr.bf16.gmra.mxu0 %v295
      %v384 = vpop.f32.mrf.mxu0
      %v385 = vadd.f32 %v300, %v384
      %v386 = vpop.f32.mrf.mxu0
      %v387 = vpop.f32.mrf.mxu0
      %v388 = vpop.f32.mrf.mxu0
      %389 = vdwg.mxu0
      %v390 = vtanh.pop %v385
      %v391 = vld [vmem:[%s3] sm:$0xf]
      %v392 = vld [vmem:[%s3 + $0x4] sm:$0xf]
      %v393 = vld [vmem:[%s3 + $0x8] sm:$0xf]
      %v394 = vld [vmem:[%s3 + $0xc] sm:$0xf]
      %v395 = vld [vmem:[%s3 + $0x10] sm:$0xf]
      %v396 = vld [vmem:[%s3 + $0x14] sm:$0xf]
      %v397 = vld [vmem:[%s3 + $0x18] sm:$0xf]
      %v398 = vld [vmem:[%s3 + $0x1c] sm:$0xf]
      %v399 = vld [vmem:[%s3 + $0x20] sm:$0xf]
      %v400 = vld [vmem:[%s3 + $0x24] sm:$0xf]
      %v401 = vld [vmem:[%s3 + $0x28] sm:$0xf]
      %v402 = vld [vmem:[%s3 + $0x2c] sm:$0xf]
      %v403 = vld [vmem:[%s3 + $0x30] sm:$0xf]
      %v404 = vld [vmem:[%s3 + $0x34] sm:$0xf]
      %v405 = vld [vmem:[%s3 + $0x38] sm:$0xf]
      %v406 = vld [vmem:[%s3 + $0x3c] sm:$0xf]
      %v407 = vld [vmem:[%s4] sm:$0x1]
      %v408 = vpack.c.bf16 %v390, %v390
      %v410 = vlaneseq
      %v411 = vshrl.u32 %v410, 7
      %v412 = vsub.s32 0, %v411
      %v413 = vrot.slane %v407, %v412
      %v431 = vunpack.c.l.b16 %v391
      %v432 = vunpack.c.l.b16 %v392
      %v433 = vunpack.c.l.b16 %v393
      %v434 = vunpack.c.l.b16 %v394
      %v435 = vunpack.c.l.b16 %v395
      %v436 = vunpack.c.l.b16 %v396
      %v437 = vunpack.c.l.b16 %v397
      %v438 = vunpack.c.l.b16 %v398
      %v439 = vunpack.c.l.b16 %v399
      %v440 = vunpack.c.l.b16 %v400
      %v441 = vunpack.c.l.b16 %v401
      %v442 = vunpack.c.l.b16 %v402
      %v443 = vunpack.c.l.b16 %v403
      %v444 = vunpack.c.l.b16 %v404
      %v445 = vunpack.c.l.b16 %v405
      %v446 = vunpack.c.l.b16 %v406
      %v447 = vpack.c.b16 %v432, %v431
      %v448 = vpack.c.b16 %v434, %v433
      %v449 = vpack.c.b16 %v436, %v435
      %v450 = vpack.c.b16 %v438, %v437
      %v451 = vpack.c.b16 %v440, %v439
      %v452 = vpack.c.b16 %v442, %v441
      %v453 = vpack.c.b16 %v444, %v443
      %v454 = vpack.c.b16 %v446, %v445
      %463 = vmatprep.subr.bf16.mxu0 0
      %464 = vmatpush1.bf16.msra.mxu0 %v454
      %465 = vmatprep.subr.bf16.mxu0 0
      %466 = vmatpush1.bf16.msra.mxu0 %v453
      %467 = vmatprep.subr.bf16.mxu0 0
      %468 = vmatpush1.bf16.msra.mxu0 %v452
      %469 = vmatprep.subr.bf16.mxu0 0
      %470 = vmatpush1.bf16.msra.mxu0 %v451
      %471 = vmatprep.subr.bf16.mxu0 0
      %472 = vmatpush1.bf16.msra.mxu0 %v450
      %473 = vmatprep.subr.bf16.mxu0 0
      %474 = vmatpush1.bf16.msra.mxu0 %v449
      %475 = vmatprep.subr.bf16.mxu0 0
      %476 = vmatpush1.bf16.msra.mxu0 %v448
      %477 = vmatprep.subr.bf16.mxu0 0
      %478 = vmatpush1.bf16.msra.mxu0 %v447
      %479 = vmatprep.subr.bf16.mxu0 0
      %480 = vmatpush2.bf16.msra.mxu0 0
      %481 = vmatprep.subr.bf16.mxu0 0
      %482 = vmatpush2.bf16.msra.mxu0 0
      %483 = vmatprep.subr.bf16.mxu0 0
      %484 = vmatpush2.bf16.msra.mxu0 0
      %485 = vmatprep.subr.bf16.mxu0 0
      %486 = vmatpush2.bf16.msra.mxu0 0
      %487 = vmatprep.subr.bf16.mxu0 0
      %488 = vmatpush2.bf16.msra.mxu0 0
      %489 = vmatprep.subr.bf16.mxu0 0
      %490 = vmatpush2.bf16.msra.mxu0 0
      %491 = vmatprep.subr.bf16.mxu0 0
      %492 = vmatpush2.bf16.msra.mxu0 0
      %493 = vmatprep.subr.bf16.mxu0 0
      %494 = vmatpush2.bf16.msra.mxu0 0
      %495 = vmatprep.mubr.bf16.mxu0 0
      %496 = vmatmul.mubr.bf16.gmra.mxu0 %v408
      %v497 = vpop.f32.mrf.mxu0
      %v498 = vadd.f32 %v413, %v497
      %v499 = vpop.f32.mrf.mxu0
      %v500 = vpop.f32.mrf.mxu0
      %v501 = vpop.f32.mrf.mxu0
      %502 = vdwg.mxu0
      %v503 = vtanh.pop %v498
      %v504 = vld [vmem:[%s5] sm:$0xf]
      %v505 = vld [vmem:[%s5 + $0x4] sm:$0xf]
      %v506 = vld [vmem:[%s5 + $0x8] sm:$0xf]
      %v507 = vld [vmem:[%s5 + $0xc] sm:$0xf]
      %v508 = vld [vmem:[%s5 + $0x10] sm:$0xf]
      %v509 = vld [vmem:[%s5 + $0x14] sm:$0xf]
      %v510 = vld [vmem:[%s5 + $0x18] sm:$0xf]
      %v511 = vld [vmem:[%s5 + $0x1c] sm:$0xf]
      %v512 = vld [vmem:[%s5 + $0x20] sm:$0xf]
      %v513 = vld [vmem:[%s5 + $0x24] sm:$0xf]
      %v514 = vld [vmem:[%s5 + $0x28] sm:$0xf]
      %v515 = vld [vmem:[%s5 + $0x2c] sm:$0xf]
      %v516 = vld [vmem:[%s5 + $0x30] sm:$0xf]
      %v517 = vld [vmem:[%s5 + $0x34] sm:$0xf]
      %v518 = vld [vmem:[%s5 + $0x38] sm:$0xf]
      %v519 = vld [vmem:[%s5 + $0x3c] sm:$0xf]
      %v520 = vld [vmem:[%s6] sm:$0x1]
      %v521 = vpack.c.bf16 %v503, %v503
      %v523 = vlaneseq
      %v524 = vshrl.u32 %v523, 7
      %v525 = vsub.s32 0, %v524
      %v526 = vrot.slane %v520, %v525
      %v544 = vunpack.c.l.b16 %v504
      %v545 = vunpack.c.l.b16 %v505
      %v546 = vunpack.c.l.b16 %v506
      %v547 = vunpack.c.l.b16 %v507
      %v548 = vunpack.c.l.b16 %v508
      %v549 = vunpack.c.l.b16 %v509
      %v550 = vunpack.c.l.b16 %v510
      %v551 = vunpack.c.l.b16 %v511
      %v552 = vunpack.c.l.b16 %v512
      %v553 = vunpack.c.l.b16 %v513
      %v554 = vunpack.c.l.b16 %v514
      %v555 = vunpack.c.l.b16 %v515
      %v556 = vunpack.c.l.b16 %v516
      %v557 = vunpack.c.l.b16 %v517
      %v558 = vunpack.c.l.b16 %v518
      %v559 = vunpack.c.l.b16 %v519
      %v560 = vpack.c.b16 %v545, %v544
      %v561 = vpack.c.b16 %v547, %v546
      %v562 = vpack.c.b16 %v549, %v548
      %v563 = vpack.c.b16 %v551, %v550
      %v564 = vpack.c.b16 %v553, %v552
      %v565 = vpack.c.b16 %v555, %v554
      %v566 = vpack.c.b16 %v557, %v556
      %v567 = vpack.c.b16 %v559, %v558
      %576 = vmatprep.subr.bf16.mxu0 0
      %577 = vmatpush1.bf16.msra.mxu0 %v567
      %578 = vmatprep.subr.bf16.mxu0 0
      %579 = vmatpush1.bf16.msra.mxu0 %v566
      %580 = vmatprep.subr.bf16.mxu0 0
      %581 = vmatpush1.bf16.msra.mxu0 %v565
      %582 = vmatprep.subr.bf16.mxu0 0
      %583 = vmatpush1.bf16.msra.mxu0 %v564
      %584 = vmatprep.subr.bf16.mxu0 0
      %585 = vmatpush1.bf16.msra.mxu0 %v563
      %586 = vmatprep.subr.bf16.mxu0 0
      %587 = vmatpush1.bf16.msra.mxu0 %v562
      %588 = vmatprep.subr.bf16.mxu0 0
      %589 = vmatpush1.bf16.msra.mxu0 %v561
      %590 = vmatprep.subr.bf16.mxu0 0
      %591 = vmatpush1.bf16.msra.mxu0 %v560
      %592 = vmatprep.subr.bf16.mxu0 0
      %593 = vmatpush2.bf16.msra.mxu0 0
      %594 = vmatprep.subr.bf16.mxu0 0
      %595 = vmatpush2.bf16.msra.mxu0 0
      %596 = vmatprep.subr.bf16.mxu0 0
      %597 = vmatpush2.bf16.msra.mxu0 0
      %598 = vmatprep.subr.bf16.mxu0 0
      %599 = vmatpush2.bf16.msra.mxu0 0
      %600 = vmatprep.subr.bf16.mxu0 0
      %601 = vmatpush2.bf16.msra.mxu0 0
      %602 = vmatprep.subr.bf16.mxu0 0
      %603 = vmatpush2.bf16.msra.mxu0 0
      %604 = vmatprep.subr.bf16.mxu0 0
      %605 = vmatpush2.bf16.msra.mxu0 0
      %606 = vmatprep.subr.bf16.mxu0 0
      %607 = vmatpush2.bf16.msra.mxu0 0
      %608 = vmatprep.mubr.bf16.mxu0 0
      %609 = vmatmul.mubr.bf16.gmra.mxu0 %v521
      %v610 = vpop.f32.mrf.mxu0
      %v611 = vadd.f32 %v526, %v610
      %v612 = vpop.f32.mrf.mxu0
      %v613 = vpop.f32.mrf.mxu0
      %v614 = vpop.f32.mrf.mxu0
      %615 = vdwg.mxu0
      %vm616 = vcmask 23552
      %617 = vst.msk [vmem:[%s273] sm:$0xff] %vm616, %v611
      %p618 = scmp.lt.s32.totalorder %s18, 1
      %s619 = scalar_select %p618, %s18, 1
      %s620 = smul.addr %s619, 8
      %s621 = scalar_lea.vmem %s7, %s620
      // Predicated region
      $region49: #{fully_connected_network.1} parent=47 // pred_check
        %p622 = pneg %p188
      $region50: #{fully_connected_network.1} parent=47 // pred_check_branch
        %624 = sbr.rel (%p622) target = $region52
      $region51: #{fully_connected_network.1} parent=47 // pred_region
        _
      $region52: #{fully_connected_network.1} parent=47 // pred_fallthru
        _
    $region48: #{fully_connected_network.1} parent=5 // pred_fallthru
      _
    %p625 = scmp.le.s32.totalorder 2, %s13
    // Predicated region
    $region53: #{fully_connected_network.1} parent=5 // pred_check
      %p626 = pneg %p625
    $region54: #{fully_connected_network.1} parent=5 // pred_check_branch
      %628 = sbr.rel (%p626) target = $region56
    $region55: #{fully_connected_network.1} parent=5 // pred_region
      %s629 = ssub.s32 %s13, 2
      // Predicated region
      $region57: #{fully_connected_network.1} parent=55 // pred_check
        %p630 = pneg %p194
      $region58: #{fully_connected_network.1} parent=55 // pred_check_branch
        %632 = sbr.rel (%p630) target = $region60
      $region59: #{fully_connected_network.1} parent=55 // pred_region
        %p633 = scmp.lt.s32.totalorder %s19, 1
        %s634 = scalar_select %p633, %s19, 1
        %s635 = smul.addr %s634, 8
        %s636 = scalar_lea.vmem %s7, %s635
      $region60: #{fully_connected_network.1} parent=55 // pred_fallthru
        _
    $region56: #{fully_connected_network.1} parent=5 // pred_fallthru
      _
  $region6: #{fully_connected_network.1} parent=0 // loop_footer
    %s17 = sadd.s32 1, %s13
  $region7: #{fully_connected_network.1} parent=0 // loop_footer_branch
    %12 = sbr.rel target = $region3
  $region8: #{fully_connected_network.1} parent=0 // loop_exit
    _

</llo_original>
